<compile_context>
chip_gen: v6e
topology: v6e:2x2x1
jax: 0.10.0
libtpu: 0.0.40
codegen_flags: <defaults>
</compile_context>

<pallas_src>
import jax
import jax.numpy as jnp
from jax.experimental import pallas as pl
from jax.experimental.pallas import tpu as pltpu


def _round_up(n, m):
    return ((n + m - 1) // m) * m


def _pick_tb(B, block_b=None):
    """Batch tile: multiple of 16 (bf16 sublane pack); even grid count for large B."""
    if block_b is not None:
        return max(16, _round_up(int(block_b), 16))
    if B <= 16:
        return 16
    # Smallest even number of tiles such that the tile is <= 1024 rows.
    n_tiles = 2
    while _round_up(pl.cdiv(B, n_tiles), 16) > 1024:
        n_tiles += 2
    return _round_up(pl.cdiv(B, n_tiles), 16)


def _mlp_diffusion_kernel(x_ref, ty_ref, tab_ref, b012_ref,
                          w0_ref, w1_ref, w2_ref, w3_ref, b3_ref, out_ref):
    """Fused MLPDiffusion forward for one batch tile.

    x_ref:    (TB, dim)  bf16   streamed activation tile
    ty_ref:   (TB, 2)    int32  col0 = t, col1 = n_steps_pad + y (or -1 if no label)
    tab_ref:  (K, 3H)    bf16   rows: [e0|e1|e2] per step, then [lab|lab|lab] per class
    b012_ref: (1, 3H)    f32    fused b0|b1|b2
    w*_ref:   bf16 weights ([in, out]);  b3_ref: (1, dim) f32
    """
    tb = x_ref.shape[0]
    k = tab_ref.shape[0]
    h_units = w1_ref.shape[0]

    ty = ty_ref[...]                                            # (TB, 2) int32
    iota = jax.lax.broadcasted_iota(jnp.int32, (tb, k), 1)
    onehot = ((iota == ty[:, 0:1]) | (iota == ty[:, 1:2])).astype(jnp.bfloat16)

    # One (TB,K)@(K,3H) embedding matmul (MXU), b0/b1/b2 folded into one f32 add.
    emb = jnp.dot(onehot, tab_ref[...], preferred_element_type=jnp.float32)
    emb = emb + b012_ref[...]                                   # (TB, 3H) f32

    # Layer 0: Linear(dim -> H) + emb0, ReLU  (bf16 MXU operands, f32 accum/epilogue).
    h = jnp.dot(x_ref[...], w0_ref[...], preferred_element_type=jnp.float32)
    h = jnp.maximum(h + emb[:, :h_units], 0.0)

    # Layer 1: Linear(H -> H) + emb1, ReLU.
    h = jnp.dot(h.astype(jnp.bfloat16), w1_ref[...], preferred_element_type=jnp.float32)
    h = jnp.maximum(h + emb[:, h_units:2 * h_units], 0.0)

    # Layer 2: Linear(H -> H) + emb2, ReLU.
    h = jnp.dot(h.astype(jnp.bfloat16), w2_ref[...], preferred_element_type=jnp.float32)
    h = jnp.maximum(h + emb[:, 2 * h_units:3 * h_units], 0.0)

    # Output layer: Linear(H -> dim).
    o = jnp.dot(h.astype(jnp.bfloat16), w3_ref[...], preferred_element_type=jnp.float32)
    out_ref[...] = (o + b3_ref[...]).astype(out_ref.dtype)


def init_params(key, n_steps, dim=20, num_units=128, num_classes=None):
    """Deterministic synthetic parameters matching MLPDiffusion.__init__ shapes."""
    keys = jax.random.split(key, 12)
    s = 0.05
    params = {
        # Linear weights stored as [in, out] (PyTorch stores [out, in]).
        "w0": jax.random.normal(keys[0], (dim, num_units), jnp.float32) * s,
        "b0": jax.random.normal(keys[1], (1, num_units), jnp.float32) * s,
        "w1": jax.random.normal(keys[2], (num_units, num_units), jnp.float32) * s,
        "b1": jax.random.normal(keys[3], (1, num_units), jnp.float32) * s,
        "w2": jax.random.normal(keys[4], (num_units, num_units), jnp.float32) * s,
        "b2": jax.random.normal(keys[5], (1, num_units), jnp.float32) * s,
        "w3": jax.random.normal(keys[6], (num_units, dim), jnp.float32) * s,
        "b3": jax.random.normal(keys[7], (1, dim), jnp.float32) * s,
        "step_emb": [
            jax.random.normal(keys[8], (n_steps, num_units), jnp.float32) * s,
            jax.random.normal(keys[9], (n_steps, num_units), jnp.float32) * s,
            jax.random.normal(keys[10], (n_steps, num_units), jnp.float32) * s,
        ],
    }
    if num_classes is not None:
        params["label_emb"] = (
            jax.random.normal(keys[11], (num_classes, num_units), jnp.float32) * s
        )
    return params


def mlp_diffusion_forward(params, x, t, y=None, block_b=None):
    """Pallas implementation of MLPDiffusion.forward.

    x: [B, dim] float32, t: [B] int32, y: optional [B] int32.
    """
    B, dim = x.shape
    H = params["w0"].shape[1]
    n_steps = params["step_emb"][0].shape[0]
    use_label = y is not None
    if use_label:
        assert "label_emb" in params, "class-conditioned call needs label_emb"
        assert y.shape == (B,)

    out_dtype = x.dtype
    wdt = jnp.bfloat16

    # --- batch tiling -------------------------------------------------------
    tb = _pick_tb(B, block_b)
    b_pad = _round_up(B, tb)
    grid = (b_pad // tb,)
    pad = b_pad - B

    # --- inputs: bf16 x tile + packed (B,2) index tile ----------------------
    x_bf = x.astype(wdt)
    if pad:
        x_bf = jnp.pad(x_bf, ((0, pad), (0, 0)))

    n_steps_pad = _round_up(n_steps, 16)
    t_pad = jnp.pad(t.astype(jnp.int32), (0, pad)) if pad else t.astype(jnp.int32)
    if use_label:
        y_pad = jnp.pad(y.astype(jnp.int32), (0, pad)) if pad else y.astype(jnp.int32)
        col1 = n_steps_pad + y_pad            # index into the label rows of the table
    else:
        col1 = jnp.full((b_pad,), -1, jnp.int32)   # never matches -> zero contribution
    ty = jnp.stack([t_pad, col1], axis=1)     # (b_pad, 2) int32

    # --- resident fused embedding table [e0|e1|e2] ++ [lab|lab|lab], bf16 ---
    step_fused = jnp.concatenate(params["step_emb"], axis=1)          # (n_steps, 3H)
    step_fused = jnp.pad(step_fused, ((0, n_steps_pad - n_steps), (0, 0)))
    if use_label:
        lab = params["label_emb"]
        num_classes = lab.shape[0]
        classes_pad = _round_up(num_classes, 16)
        lab_fused = jnp.pad(jnp.tile(lab, (1, 3)),
                            ((0, classes_pad - num_classes), (0, 0)))
        fused_tab = jnp.concatenate([step_fused, lab_fused], axis=0)
    else:
        fused_tab = step_fused
    fused_tab = fused_tab.astype(wdt)                                  # (K, 3H)

    # Fused f32 bias b0|b1|b2 (bias precision kept at f32).
    b012 = jnp.concatenate(
        [params["b0"], params["b1"], params["b2"]], axis=1).astype(jnp.float32)

    w0 = params["w0"].astype(wdt)
    w1 = params["w1"].astype(wdt)
    w2 = params["w2"].astype(wdt)
    w3 = params["w3"].astype(wdt)
    b3 = params["b3"].astype(jnp.float32)

    def tile_spec(width):
        return pl.BlockSpec((tb, width), lambda i: (i, 0))

    def resident_spec(shape):
        return pl.BlockSpec(shape, lambda i: (0,) * len(shape))

    in_arrays = [x_bf, ty, fused_tab, b012, w0, w1, w2, w3, b3]
    in_specs = [
        tile_spec(dim),
        tile_spec(2),
        resident_spec(fused_tab.shape),
        resident_spec(b012.shape),
        resident_spec(w0.shape),
        resident_spec(w1.shape),
        resident_spec(w2.shape),
        resident_spec(w3.shape),
        resident_spec(b3.shape),
    ]

    out = pl.pallas_call(
        _mlp_diffusion_kernel,
        out_shape=jax.ShapeDtypeStruct((b_pad, dim), out_dtype),
        grid=grid,
        in_specs=in_specs,
        out_specs=tile_spec(dim),
        compiler_params=pltpu.CompilerParams(
            dimension_semantics=("parallel",),
        ),
    )(*in_arrays)
    return out[:B]


def _reference_forward(params, x, t, y=None):
    """Pure-JAX f32 reference mirroring the PyTorch forward exactly."""
    if y is not None:
        class_emb = params["label_emb"][y]
    h = x
    for i, (wn, bn) in enumerate((("w0", "b0"), ("w1", "b1"), ("w2", "b2"))):
        emb = params["step_emb"][i][t]
        if y is not None:
            emb = emb + class_emb
        h = h @ params[wn] + params[bn][0] + emb
        h = jnp.maximum(h, 0.0)
    return h @ params["w3"] + params["b3"][0]


if __name__ == "__main__":
    key = jax.random.PRNGKey(0)
    k_param, k_x, k_t, k_y = jax.random.split(key, 4)

    n_steps = 100
    dim = 20
    num_units = 128
    num_classes = 10
    B = 40

    params = init_params(k_param, n_steps, dim=dim, num_units=num_units,
                         num_classes=num_classes)

    x = jax.random.normal(k_x, (B, dim), jnp.float32)
    t = jax.random.randint(k_t, (B,), 0, n_steps, jnp.int32)
    y = jax.random.randint(k_y, (B,), 0, num_classes, jnp.int32)

    # Class-conditioned, default tiling (B=40 -> TB=32, grid=(2,): even step count).
    out_cond = jax.block_until_ready(mlp_diffusion_forward(params, x, t, y))
    # Unconditioned, forced small tile to exercise padding + multi-step grid
    # (TB=16 -> B padded 40->48, grid=(3,)).
    out_uncond = jax.block_until_ready(
        mlp_diffusion_forward(params, x, t, None, block_b=16))

    ref_cond = _reference_forward(params, x, t, y)
    ref_uncond = _reference_forward(params, x, t, None)

    assert out_cond.shape == (B, dim)
    assert out_uncond.shape == (B, dim)
    # bf16 MXU operands with f32 accumulation vs an f32 reference -> loosened tol.
    assert jnp.allclose(out_cond, ref_cond, atol=2e-2, rtol=2e-2), (
        float(jnp.max(jnp.abs(out_cond - ref_cond))))
    assert jnp.allclose(out_uncond, ref_uncond, atol=2e-2, rtol=2e-2), (
        float(jnp.max(jnp.abs(out_uncond - ref_uncond))))

    print("KERNEL_OK")
</pallas_src>

<mosaic_0001>
module attributes {stable_mosaic.version = 11 : i64} {
  func.func @_mlp_diffusion_kernel(%arg0: i32, %arg1: memref<32x20xbf16, #tpu.memory_space<vmem>>, %arg2: memref<32x2xi32, #tpu.memory_space<vmem>>, %arg3: memref<128x384xbf16, #tpu.memory_space<vmem>>, %arg4: memref<1x384xf32, #tpu.memory_space<vmem>>, %arg5: memref<20x128xbf16, #tpu.memory_space<vmem>>, %arg6: memref<128x128xbf16, #tpu.memory_space<vmem>>, %arg7: memref<128x128xbf16, #tpu.memory_space<vmem>>, %arg8: memref<128x20xbf16, #tpu.memory_space<vmem>>, %arg9: memref<1x20xf32, #tpu.memory_space<vmem>>, %arg10: memref<32x20xf32, #tpu.memory_space<vmem>>) attributes {dimension_semantics = [#tpu.dimension_semantics<parallel>], iteration_bounds = array<i64: 2>, scalar_prefetch = 0 : i64, scratch_operands = 0 : i64, tpu.core_type = #tpu.core_type<tc>, window_params = [{transform_indices = @transform_0, window_bounds = array<i64: 32, 20>}, {transform_indices = @transform_1, window_bounds = array<i64: 32, 2>}, {pipeline_mode = #tpu.pipeline_mode<synchronous>, transform_indices = @transform_2, window_bounds = array<i64: 128, 384>}, {pipeline_mode = #tpu.pipeline_mode<synchronous>, transform_indices = @transform_3, window_bounds = array<i64: 1, 384>}, {pipeline_mode = #tpu.pipeline_mode<synchronous>, transform_indices = @transform_4, window_bounds = array<i64: 20, 128>}, {pipeline_mode = #tpu.pipeline_mode<synchronous>, transform_indices = @transform_5, window_bounds = array<i64: 128, 128>}, {pipeline_mode = #tpu.pipeline_mode<synchronous>, transform_indices = @transform_6, window_bounds = array<i64: 128, 128>}, {pipeline_mode = #tpu.pipeline_mode<synchronous>, transform_indices = @transform_7, window_bounds = array<i64: 128, 20>}, {pipeline_mode = #tpu.pipeline_mode<synchronous>, transform_indices = @transform_8, window_bounds = array<i64: 1, 20>}, {transform_indices = @transform_9, window_bounds = array<i64: 32, 20>}]} {
    %c0 = arith.constant 0 : index
    %c0_0 = arith.constant 0 : index
    %0 = vector.load %arg2[%c0, %c0_0] : memref<32x2xi32, #tpu.memory_space<vmem>>, vector<32x2xi32>
    %1 = tpu.iota {dimensions = array<i32: 1>} : vector<32x128xi32>
    %2 = vector.extract_strided_slice %0 {offsets = [0, 0], sizes = [32, 1], strides = [1, 1]} : vector<32x2xi32> to vector<32x1xi32>
    %3 = vector.broadcast %2 : vector<32x1xi32> to vector<32x128xi32>
    %4 = arith.cmpi eq, %1, %3 : vector<32x128xi32>
    %5 = vector.extract_strided_slice %0 {offsets = [0, 1], sizes = [32, 1], strides = [1, 1]} : vector<32x2xi32> to vector<32x1xi32>
    %6 = vector.broadcast %5 : vector<32x1xi32> to vector<32x128xi32>
    %7 = arith.cmpi eq, %1, %6 : vector<32x128xi32>
    %8 = arith.ori %4, %7 : vector<32x128xi1>
    %9 = arith.extui %8 : vector<32x128xi1> to vector<32x128xi32>
    %10 = arith.sitofp %9 : vector<32x128xi32> to vector<32x128xf32>
    %11 = arith.truncf %10 : vector<32x128xf32> to vector<32x128xbf16>
    %c0_1 = arith.constant 0 : index
    %c0_2 = arith.constant 0 : index
    %12 = vector.load %arg3[%c0_1, %c0_2] : memref<128x384xbf16, #tpu.memory_space<vmem>>, vector<128x384xbf16>
    %cst = arith.constant dense<0.000000e+00> : vector<32x384xf32>
    %13 = tpu.matmul %11, %12, %cst {dimension_numbers = #tpu.dot_dimension_numbers<[1], [0], [0], [1], [0, 0, 1, 1], [], []>} : vector<32x128xbf16>, vector<128x384xbf16>, vector<32x384xf32> -> vector<32x384xf32>
    %c0_3 = arith.constant 0 : index
    %c0_4 = arith.constant 0 : index
    %14 = vector.load %arg4[%c0_3, %c0_4] : memref<1x384xf32, #tpu.memory_space<vmem>>, vector<1x384xf32>
    %15 = vector.broadcast %14 : vector<1x384xf32> to vector<32x384xf32>
    %16 = arith.addf %13, %15 : vector<32x384xf32>
    %c0_5 = arith.constant 0 : index
    %c0_6 = arith.constant 0 : index
    %17 = vector.load %arg1[%c0_5, %c0_6] : memref<32x20xbf16, #tpu.memory_space<vmem>>, vector<32x20xbf16>
    %c0_7 = arith.constant 0 : index
    %c0_8 = arith.constant 0 : index
    %18 = vector.load %arg5[%c0_7, %c0_8] : memref<20x128xbf16, #tpu.memory_space<vmem>>, vector<20x128xbf16>
    %cst_9 = arith.constant dense<0.000000e+00> : vector<32x128xf32>
    %19 = tpu.matmul %17, %18, %cst_9 {dimension_numbers = #tpu.dot_dimension_numbers<[1], [0], [0], [1], [0, 0, 1, 1], [], []>} : vector<32x20xbf16>, vector<20x128xbf16>, vector<32x128xf32> -> vector<32x128xf32>
    %20 = vector.extract_strided_slice %16 {offsets = [0, 0], sizes = [32, 128], strides = [1, 1]} : vector<32x384xf32> to vector<32x128xf32>
    %21 = arith.addf %19, %20 : vector<32x128xf32>
    %cst_10 = arith.constant 0.000000e+00 : f32
    %22 = vector.broadcast %cst_10 : f32 to vector<32x128xf32>
    %23 = arith.maximumf %21, %22 : vector<32x128xf32>
    %24 = arith.truncf %23 : vector<32x128xf32> to vector<32x128xbf16>
    %c0_11 = arith.constant 0 : index
    %c0_12 = arith.constant 0 : index
    %25 = vector.load %arg6[%c0_11, %c0_12] : memref<128x128xbf16, #tpu.memory_space<vmem>>, vector<128x128xbf16>
    %cst_13 = arith.constant dense<0.000000e+00> : vector<32x128xf32>
    %26 = tpu.matmul %24, %25, %cst_13 {dimension_numbers = #tpu.dot_dimension_numbers<[1], [0], [0], [1], [0, 0, 1, 1], [], []>} : vector<32x128xbf16>, vector<128x128xbf16>, vector<32x128xf32> -> vector<32x128xf32>
    %27 = vector.extract_strided_slice %16 {offsets = [0, 128], sizes = [32, 128], strides = [1, 1]} : vector<32x384xf32> to vector<32x128xf32>
    %28 = arith.addf %26, %27 : vector<32x128xf32>
    %cst_14 = arith.constant 0.000000e+00 : f32
    %29 = vector.broadcast %cst_14 : f32 to vector<32x128xf32>
    %30 = arith.maximumf %28, %29 : vector<32x128xf32>
    %31 = arith.truncf %30 : vector<32x128xf32> to vector<32x128xbf16>
    %c0_15 = arith.constant 0 : index
    %c0_16 = arith.constant 0 : index
    %32 = vector.load %arg7[%c0_15, %c0_16] : memref<128x128xbf16, #tpu.memory_space<vmem>>, vector<128x128xbf16>
    %cst_17 = arith.constant dense<0.000000e+00> : vector<32x128xf32>
    %33 = tpu.matmul %31, %32, %cst_17 {dimension_numbers = #tpu.dot_dimension_numbers<[1], [0], [0], [1], [0, 0, 1, 1], [], []>} : vector<32x128xbf16>, vector<128x128xbf16>, vector<32x128xf32> -> vector<32x128xf32>
    %34 = vector.extract_strided_slice %16 {offsets = [0, 256], sizes = [32, 128], strides = [1, 1]} : vector<32x384xf32> to vector<32x128xf32>
    %35 = arith.addf %33, %34 : vector<32x128xf32>
    %cst_18 = arith.constant 0.000000e+00 : f32
    %36 = vector.broadcast %cst_18 : f32 to vector<32x128xf32>
    %37 = arith.maximumf %35, %36 : vector<32x128xf32>
    %38 = arith.truncf %37 : vector<32x128xf32> to vector<32x128xbf16>
    %c0_19 = arith.constant 0 : index
    %c0_20 = arith.constant 0 : index
    %39 = vector.load %arg8[%c0_19, %c0_20] : memref<128x20xbf16, #tpu.memory_space<vmem>>, vector<128x20xbf16>
    %cst_21 = arith.constant dense<0.000000e+00> : vector<32x20xf32>
    %40 = tpu.matmul %38, %39, %cst_21 {dimension_numbers = #tpu.dot_dimension_numbers<[1], [0], [0], [1], [0, 0, 1, 1], [], []>} : vector<32x128xbf16>, vector<128x20xbf16>, vector<32x20xf32> -> vector<32x20xf32>
    %c0_22 = arith.constant 0 : index
    %c0_23 = arith.constant 0 : index
    %41 = vector.load %arg9[%c0_22, %c0_23] : memref<1x20xf32, #tpu.memory_space<vmem>>, vector<1x20xf32>
    %42 = vector.broadcast %41 : vector<1x20xf32> to vector<32x20xf32>
    %43 = arith.addf %40, %42 : vector<32x20xf32>
    %c0_24 = arith.constant 0 : index
    %c0_25 = arith.constant 0 : index
    %44 = vector.load %arg10[%c0_24, %c0_25] : memref<32x20xf32, #tpu.memory_space<vmem>>, vector<32x20xf32>
    tpu.vector_store %arg10[%c0_24, %c0_25], %43 {strides = array<i32>} : memref<32x20xf32, #tpu.memory_space<vmem>>, vector<32x20xf32>,
    return
  }
  func.func @transform_0(%arg0: i32) -> (i32, i32) {
    %c0_i32 = arith.constant 0 : i32
    %c0_i32_0 = arith.constant 0 : i32
    return %arg0, %c0_i32 : i32, i32
  }
  func.func @transform_1(%arg0: i32) -> (i32, i32) {
    %c0_i32 = arith.constant 0 : i32
    %c0_i32_0 = arith.constant 0 : i32
    return %arg0, %c0_i32 : i32, i32
  }
  func.func @transform_2(%arg0: i32) -> (i32, i32) {
    %c0_i32 = arith.constant 0 : i32
    %c0_i32_0 = arith.constant 0 : i32
    %c0_i32_1 = arith.constant 0 : i32
    return %c0_i32, %c0_i32_0 : i32, i32
  }
  func.func @transform_3(%arg0: i32) -> (i32, i32) {
    %c0_i32 = arith.constant 0 : i32
    %c0_i32_0 = arith.constant 0 : i32
    %c0_i32_1 = arith.constant 0 : i32
    return %c0_i32, %c0_i32_0 : i32, i32
  }
  func.func @transform_4(%arg0: i32) -> (i32, i32) {
    %c0_i32 = arith.constant 0 : i32
    %c0_i32_0 = arith.constant 0 : i32
    %c0_i32_1 = arith.constant 0 : i32
    return %c0_i32, %c0_i32_0 : i32, i32
  }
  func.func @transform_5(%arg0: i32) -> (i32, i32) {
    %c0_i32 = arith.constant 0 : i32
    %c0_i32_0 = arith.constant 0 : i32
    %c0_i32_1 = arith.constant 0 : i32
    return %c0_i32, %c0_i32_0 : i32, i32
  }
  func.func @transform_6(%arg0: i32) -> (i32, i32) {
    %c0_i32 = arith.constant 0 : i32
    %c0_i32_0 = arith.constant 0 : i32
    %c0_i32_1 = arith.constant 0 : i32
    return %c0_i32, %c0_i32_0 : i32, i32
  }
  func.func @transform_7(%arg0: i32) -> (i32, i32) {
    %c0_i32 = arith.constant 0 : i32
    %c0_i32_0 = arith.constant 0 : i32
    %c0_i32_1 = arith.constant 0 : i32
    return %c0_i32, %c0_i32_0 : i32, i32
  }
  func.func @transform_8(%arg0: i32) -> (i32, i32) {
    %c0_i32 = arith.constant 0 : i32
    %c0_i32_0 = arith.constant 0 : i32
    %c0_i32_1 = arith.constant 0 : i32
    return %c0_i32, %c0_i32_0 : i32, i32
  }
  func.func @transform_9(%arg0: i32) -> (i32, i32) {
    %c0_i32 = arith.constant 0 : i32
    %c0_i32_0 = arith.constant 0 : i32
    return %arg0, %c0_i32 : i32, i32
  }
}

</mosaic_0001>

<llo_original>
// kernel: tpu_custom_call.1
$region0: #{tpu_custom_call.1}
  #allocation0 [shape = 'u32[]', space=smem, size = 0x4, offset = 0x4, fixed_abs, tag = 'smem constant byte address 0x4 - core index']
  #allocation1 [shape = 'u32[144,128]{1,0:T(1,128)}', space=vmem, size = 0x12000, scoped, tag = 'internal scratch']
  %s0 = inlined_call_operand.vmem [shape: bf16[64,20], index: 0, kind: input, shape index: {}]
  %s1 = inlined_call_operand.vmem [shape: s32[64,2], index: 1, kind: input, shape index: {}]
  %s2 = inlined_call_operand.hbm [shape: bf16[128,384], index: 2, kind: input, shape index: {}]
  %s3 = inlined_call_operand.vmem [shape: f32[1,384], index: 3, kind: input, shape index: {}]
  %s4 = inlined_call_operand.vmem [shape: bf16[20,128], index: 4, kind: input, shape index: {}]
  %s5 = inlined_call_operand.vmem [shape: bf16[128,128], index: 5, kind: input, shape index: {}]
  %s6 = inlined_call_operand.vmem [shape: bf16[128,128], index: 6, kind: input, shape index: {}]
  %s7 = inlined_call_operand.vmem [shape: bf16[128,20], index: 7, kind: input, shape index: {}]
  %s8 = inlined_call_operand.vmem [shape: f32[1,20], index: 8, kind: input, shape index: {}]
  %s9 = inlined_call_operand.vmem [shape: f32[64,20], index: 9, kind: output, shape index: {}]
  %s10 = sld [smem:[#allocation0]]
  $region73: #{tpu_custom_call.1} parent=0
    _
  %s12 = ssub.s32 1, %s10
  %s13 = scalar_select 0, %s12, %s10
  $region1: #{tpu_custom_call.1} parent=0
    #allocation2 [shape = 'u8[98304]{0}', space=vmem, size = 0x18000, scoped, tag = 'input window, operand 2, single buffered']
    #allocation3 [shape = 's32[2]{0}', space=sflag, size = 0x8, scoped, tag = 'scoped memory for tpu_custom_call.1']
    %14 = vsyncpa [#allocation3], 0
    loop: start=0, step=1, limit=4
    $region2: #{tpu_custom_call.1} parent=1 // loop_pre_header
      _
    $region3: #{tpu_custom_call.1} parent=1 // loop_header
      %s16 = sphi 0, %s20
      %p17 = scmp.ge.s32.totalorder %s16, 4
      %s26 = sphi 0, %s28
      %s29 = sphi 0, %s26
      %s30 = sphi 0, %s29
      %s46 = sphi 0, %s30
      %s52 = sphi 0, %s54
      %s55 = sphi 0, %s52
      %s56 = sphi 0, %s55
      %s72 = sphi 0, %s56
      %s76 = sphi 0, %s76
      %s78 = sphi 0, %s76
      %s79 = sphi 0, %s78
      %s93 = sphi 0, %s79
      %s97 = sphi 0, %s97
      %s99 = sphi 0, %s97
      %s100 = sphi 0, %s99
      %s114 = sphi 0, %s100
      %s118 = sphi 0, %s118
      %s120 = sphi 0, %s118
      %s121 = sphi 0, %s120
      %s135 = sphi 0, %s121
      %s139 = sphi 0, %s139
      %s141 = sphi 0, %s139
      %s142 = sphi 0, %s141
      %s156 = sphi 0, %s142
      %s160 = sphi 0, %s160
      %s162 = sphi 0, %s160
      %s163 = sphi 0, %s162
      %s177 = sphi 0, %s163
      %s181 = sphi 0, %s181
      %s183 = sphi 0, %s181
      %s184 = sphi 0, %s183
      %s198 = sphi 0, %s184
      %s202 = sphi 0, %s202
      %s204 = sphi 0, %s202
      %s205 = sphi 0, %s204
      %s219 = sphi 0, %s205
      %s225 = sphi 0, %s227
      %s228 = sphi 0, %s225
      %s229 = sphi 0, %s228
      %s245 = sphi 0, %s229
    $region4: #{tpu_custom_call.1} parent=1 // loop_header_branch
      %19 = sbr.rel (%p17) target = $region8
    $region5: #{tpu_custom_call.1} parent=1 // loop_body
      %s21 = ssub.s32 %s16, 1
      %s22 = ssub.s32 %s16, 2
      %s23 = sadd.s32 %s16, 1
      %s24 = ssub.s32 %s16, %s23
      %p25 = scmp.eq.s32.totalorder %s24, 0
      %s27 = sadd.s32 %s26, 1
      %s28 = scalar_select %p25, %s26, %s27
      %p31 = pneg %p25
      %p32 = scmp.eq.s32.totalorder %s16, 1
      %p33 = por %p31, %p32
      %p34 = scmp.ne.s32.totalorder %s26, %s29
      %p35 = scmp.eq.s32.totalorder %s16, 0
      %p36 = por %p34, %p35
      %p37 = scmp.ne.s32.totalorder %s26, %s29
      %p38 = scmp.eq.s32.totalorder %s21, 1
      %p39 = por %p37, %p38
      %p40 = scmp.ne.s32.totalorder %s29, %s30
      %p41 = scmp.eq.s32.totalorder %s21, 0
      %p42 = por %p40, %p41
      %p43 = scmp.ne.s32.totalorder %s29, %s30
      %p44 = scmp.eq.s32.totalorder %s22, 1
      %p45 = por %p43, %p44
      %p47 = scmp.ne.s32.totalorder %s30, %s46
      %p48 = scmp.eq.s32.totalorder %s22, 0
      %p49 = por %p47, %p48
      %s50 = ssub.s32 %s16, %s23
      %p51 = scmp.eq.s32.totalorder %s50, 0
      %s53 = sadd.s32 %s52, 1
      %s54 = scalar_select %p51, %s52, %s53
      %p57 = pneg %p51
      %p58 = scmp.eq.s32.totalorder %s16, 1
      %p59 = por %p57, %p58
      %p60 = scmp.ne.s32.totalorder %s52, %s55
      %p61 = scmp.eq.s32.totalorder %s16, 0
      %p62 = por %p60, %p61
      %p63 = scmp.ne.s32.totalorder %s52, %s55
      %p64 = scmp.eq.s32.totalorder %s21, 1
      %p65 = por %p63, %p64
      %p66 = scmp.ne.s32.totalorder %s55, %s56
      %p67 = scmp.eq.s32.totalorder %s21, 0
      %p68 = por %p66, %p67
      %p69 = scmp.ne.s32.totalorder %s55, %s56
      %p70 = scmp.eq.s32.totalorder %s22, 1
      %p71 = por %p69, %p70
      %p73 = scmp.ne.s32.totalorder %s56, %s72
      %p74 = scmp.eq.s32.totalorder %s22, 0
      %p75 = por %p73, %p74
      %s77 = sadd.s32 %s76, 1
      %p80 = scmp.eq.s32.totalorder %s16, 1
      %p81 = scmp.ne.s32.totalorder %s76, %s78
      %p82 = scmp.eq.s32.totalorder %s16, 0
      %p83 = por %p81, %p82
      %p84 = scmp.ne.s32.totalorder %s76, %s78
      %p85 = scmp.eq.s32.totalorder %s21, 1
      %p86 = por %p84, %p85
      %p87 = scmp.ne.s32.totalorder %s78, %s79
      %p88 = scmp.eq.s32.totalorder %s21, 0
      %p89 = por %p87, %p88
      %p90 = scmp.ne.s32.totalorder %s78, %s79
      %p91 = scmp.eq.s32.totalorder %s22, 1
      %p92 = por %p90, %p91
      %p94 = scmp.ne.s32.totalorder %s79, %s93
      %p95 = scmp.eq.s32.totalorder %s22, 0
      %p96 = por %p94, %p95
      %s98 = sadd.s32 %s97, 1
      %p101 = scmp.eq.s32.totalorder %s16, 1
      %p102 = scmp.ne.s32.totalorder %s97, %s99
      %p103 = scmp.eq.s32.totalorder %s16, 0
      %p104 = por %p102, %p103
      %p105 = scmp.ne.s32.totalorder %s97, %s99
      %p106 = scmp.eq.s32.totalorder %s21, 1
      %p107 = por %p105, %p106
      %p108 = scmp.ne.s32.totalorder %s99, %s100
      %p109 = scmp.eq.s32.totalorder %s21, 0
      %p110 = por %p108, %p109
      %p111 = scmp.ne.s32.totalorder %s99, %s100
      %p112 = scmp.eq.s32.totalorder %s22, 1
      %p113 = por %p111, %p112
      %p115 = scmp.ne.s32.totalorder %s100, %s114
      %p116 = scmp.eq.s32.totalorder %s22, 0
      %p117 = por %p115, %p116
      %s119 = sadd.s32 %s118, 1
      %p122 = scmp.eq.s32.totalorder %s16, 1
      %p123 = scmp.ne.s32.totalorder %s118, %s120
      %p124 = scmp.eq.s32.totalorder %s16, 0
      %p125 = por %p123, %p124
      %p126 = scmp.ne.s32.totalorder %s118, %s120
      %p127 = scmp.eq.s32.totalorder %s21, 1
      %p128 = por %p126, %p127
      %p129 = scmp.ne.s32.totalorder %s120, %s121
      %p130 = scmp.eq.s32.totalorder %s21, 0
      %p131 = por %p129, %p130
      %p132 = scmp.ne.s32.totalorder %s120, %s121
      %p133 = scmp.eq.s32.totalorder %s22, 1
      %p134 = por %p132, %p133
      %p136 = scmp.ne.s32.totalorder %s121, %s135
      %p137 = scmp.eq.s32.totalorder %s22, 0
      %p138 = por %p136, %p137
      %s140 = sadd.s32 %s139, 1
      %p143 = scmp.eq.s32.totalorder %s16, 1
      %p144 = scmp.ne.s32.totalorder %s139, %s141
      %p145 = scmp.eq.s32.totalorder %s16, 0
      %p146 = por %p144, %p145
      %p147 = scmp.ne.s32.totalorder %s139, %s141
      %p148 = scmp.eq.s32.totalorder %s21, 1
      %p149 = por %p147, %p148
      %p150 = scmp.ne.s32.totalorder %s141, %s142
      %p151 = scmp.eq.s32.totalorder %s21, 0
      %p152 = por %p150, %p151
      %p153 = scmp.ne.s32.totalorder %s141, %s142
      %p154 = scmp.eq.s32.totalorder %s22, 1
      %p155 = por %p153, %p154
      %p157 = scmp.ne.s32.totalorder %s142, %s156
      %p158 = scmp.eq.s32.totalorder %s22, 0
      %p159 = por %p157, %p158
      %s161 = sadd.s32 %s160, 1
      %p164 = scmp.eq.s32.totalorder %s16, 1
      %p165 = scmp.ne.s32.totalorder %s160, %s162
      %p166 = scmp.eq.s32.totalorder %s16, 0
      %p167 = por %p165, %p166
      %p168 = scmp.ne.s32.totalorder %s160, %s162
      %p169 = scmp.eq.s32.totalorder %s21, 1
      %p170 = por %p168, %p169
      %p171 = scmp.ne.s32.totalorder %s162, %s163
      %p172 = scmp.eq.s32.totalorder %s21, 0
      %p173 = por %p171, %p172
      %p174 = scmp.ne.s32.totalorder %s162, %s163
      %p175 = scmp.eq.s32.totalorder %s22, 1
      %p176 = por %p174, %p175
      %p178 = scmp.ne.s32.totalorder %s163, %s177
      %p179 = scmp.eq.s32.totalorder %s22, 0
      %p180 = por %p178, %p179
      %s182 = sadd.s32 %s181, 1
      %p185 = scmp.eq.s32.totalorder %s16, 1
      %p186 = scmp.ne.s32.totalorder %s181, %s183
      %p187 = scmp.eq.s32.totalorder %s16, 0
      %p188 = por %p186, %p187
      %p189 = scmp.ne.s32.totalorder %s181, %s183
      %p190 = scmp.eq.s32.totalorder %s21, 1
      %p191 = por %p189, %p190
      %p192 = scmp.ne.s32.totalorder %s183, %s184
      %p193 = scmp.eq.s32.totalorder %s21, 0
      %p194 = por %p192, %p193
      %p195 = scmp.ne.s32.totalorder %s183, %s184
      %p196 = scmp.eq.s32.totalorder %s22, 1
      %p197 = por %p195, %p196
      %p199 = scmp.ne.s32.totalorder %s184, %s198
      %p200 = scmp.eq.s32.totalorder %s22, 0
      %p201 = por %p199, %p200
      %s203 = sadd.s32 %s202, 1
      %p206 = scmp.eq.s32.totalorder %s16, 1
      %p207 = scmp.ne.s32.totalorder %s202, %s204
      %p208 = scmp.eq.s32.totalorder %s16, 0
      %p209 = por %p207, %p208
      %p210 = scmp.ne.s32.totalorder %s202, %s204
      %p211 = scmp.eq.s32.totalorder %s21, 1
      %p212 = por %p210, %p211
      %p213 = scmp.ne.s32.totalorder %s204, %s205
      %p214 = scmp.eq.s32.totalorder %s21, 0
      %p215 = por %p213, %p214
      %p216 = scmp.ne.s32.totalorder %s204, %s205
      %p217 = scmp.eq.s32.totalorder %s22, 1
      %p218 = por %p216, %p217
      %p220 = scmp.ne.s32.totalorder %s205, %s219
      %p221 = scmp.eq.s32.totalorder %s22, 0
      %p222 = por %p220, %p221
      %s223 = ssub.s32 %s16, %s23
      %p224 = scmp.eq.s32.totalorder %s223, 0
      %s226 = sadd.s32 %s225, 1
      %s227 = scalar_select %p224, %s225, %s226
      %p230 = pneg %p224
      %p231 = scmp.eq.s32.totalorder %s16, 1
      %p232 = por %p230, %p231
      %p233 = scmp.ne.s32.totalorder %s225, %s228
      %p234 = scmp.eq.s32.totalorder %s16, 0
      %p235 = por %p233, %p234
      %p236 = scmp.ne.s32.totalorder %s225, %s228
      %p237 = scmp.eq.s32.totalorder %s21, 1
      %p238 = por %p236, %p237
      %p239 = scmp.ne.s32.totalorder %s228, %s229
      %p240 = scmp.eq.s32.totalorder %s21, 0
      %p241 = por %p239, %p240
      %p242 = scmp.ne.s32.totalorder %s228, %s229
      %p243 = scmp.eq.s32.totalorder %s22, 1
      %p244 = por %p242, %p243
      %p246 = scmp.ne.s32.totalorder %s229, %s245
      %p247 = scmp.eq.s32.totalorder %s22, 0
      %p248 = por %p246, %p247
      %p249 = scmp.le.s32.totalorder 1, %s16
      %p250 = scmp.lt.s32.totalorder %s16, 3
      %p251 = pnand %p249, %p250
      %p252 = pneg %p251
      // Predicated region
      $region9: #{tpu_custom_call.1} parent=5 // pred_check
        _
      $region10: #{tpu_custom_call.1} parent=5 // pred_check_branch
        %254 = sbr.rel (%p251) target = $region12
      $region11: #{tpu_custom_call.1} parent=5 // pred_region
        %s255 = ssub.s32 %s16, 1
        // Predicated region
        $region13: #{tpu_custom_call.1} parent=11 // pred_check
          %p256 = pneg %p89
        $region14: #{tpu_custom_call.1} parent=11 // pred_check_branch
          %258 = sbr.rel (%p256) target = $region16
        $region15: #{tpu_custom_call.1} parent=11 // pred_region
          %s260 = ssub.s32 3072, 3072
          %261 = vsyncadd [#allocation3], %s260
          %s262 = sshll.u32 [#allocation2], 4
          %s263 = int_to_ptr.vmem [resolvable:$true] %s262
          %268 = dma.hbm_to_vmem [thread:$0]  %s2, 3072, %s263, [#allocation3], 192, 192, 12
        $region16: #{tpu_custom_call.1} parent=11 // pred_fallthru
          _
        // Predicated region
        $region17: #{tpu_custom_call.1} parent=11 // pred_check
          %p269 = pneg %p110
        $region18: #{tpu_custom_call.1} parent=11 // pred_check_branch
          %271 = sbr.rel (%p269) target = $region20
        $region19: #{tpu_custom_call.1} parent=11 // pred_region
          _
        $region20: #{tpu_custom_call.1} parent=11 // pred_fallthru
          _
        // Predicated region
        $region21: #{tpu_custom_call.1} parent=11 // pred_check
          %p272 = pneg %p131
        $region22: #{tpu_custom_call.1} parent=11 // pred_check_branch
          %274 = sbr.rel (%p272) target = $region24
        $region23: #{tpu_custom_call.1} parent=11 // pred_region
          _
        $region24: #{tpu_custom_call.1} parent=11 // pred_fallthru
          _
        // Predicated region
        $region25: #{tpu_custom_call.1} parent=11 // pred_check
          %p275 = pneg %p152
        $region26: #{tpu_custom_call.1} parent=11 // pred_check_branch
          %277 = sbr.rel (%p275) target = $region28
        $region27: #{tpu_custom_call.1} parent=11 // pred_region
          _
        $region28: #{tpu_custom_call.1} parent=11 // pred_fallthru
          _
        // Predicated region
        $region29: #{tpu_custom_call.1} parent=11 // pred_check
          %p278 = pneg %p173
        $region30: #{tpu_custom_call.1} parent=11 // pred_check_branch
          %280 = sbr.rel (%p278) target = $region32
        $region31: #{tpu_custom_call.1} parent=11 // pred_region
          _
        $region32: #{tpu_custom_call.1} parent=11 // pred_fallthru
          _
        // Predicated region
        $region33: #{tpu_custom_call.1} parent=11 // pred_check
          %p281 = pneg %p194
        $region34: #{tpu_custom_call.1} parent=11 // pred_check_branch
          %283 = sbr.rel (%p281) target = $region36
        $region35: #{tpu_custom_call.1} parent=11 // pred_region
          _
        $region36: #{tpu_custom_call.1} parent=11 // pred_fallthru
          _
        // Predicated region
        $region37: #{tpu_custom_call.1} parent=11 // pred_check
          %p284 = pneg %p215
        $region38: #{tpu_custom_call.1} parent=11 // pred_check_branch
          %286 = sbr.rel (%p284) target = $region40
        $region39: #{tpu_custom_call.1} parent=11 // pred_region
          _
        $region40: #{tpu_custom_call.1} parent=11 // pred_fallthru
          _
      $region12: #{tpu_custom_call.1} parent=5 // pred_fallthru
        _
      %p287 = scmp.lt.s32.totalorder %s16, 2
      // Predicated region
      $region41: #{tpu_custom_call.1} parent=5 // pred_check
        %p288 = pneg %p287
      $region42: #{tpu_custom_call.1} parent=5 // pred_check_branch
        %290 = sbr.rel (%p288) target = $region44
      $region43: #{tpu_custom_call.1} parent=5 // pred_region
        // Predicated region
        $region45: #{tpu_custom_call.1} parent=43 // pred_check
          %p291 = pneg %p36
        $region46: #{tpu_custom_call.1} parent=43 // pred_check_branch
          %293 = sbr.rel (%p291) target = $region48
        $region47: #{tpu_custom_call.1} parent=43 // pred_region
          %s294 = smul.u32 4, %s16
          %p295 = scmp.lt.s32.totalorder %s294, 7
          %s296 = scalar_select %p295, %s294, 7
          %s297 = smul.addr %s296, 4
          %s298 = scalar_lea.vmem %s0, %s297
          %s299 = smul.u32 4, %s16
        $region48: #{tpu_custom_call.1} parent=43 // pred_fallthru
          _
        // Predicated region
        $region49: #{tpu_custom_call.1} parent=43 // pred_check
          %p300 = pneg %p62
        $region50: #{tpu_custom_call.1} parent=43 // pred_check_branch
          %302 = sbr.rel (%p300) target = $region52
        $region51: #{tpu_custom_call.1} parent=43 // pred_region
          %s303 = smul.u32 4, %s16
          %p304 = scmp.lt.s32.totalorder %s303, 7
          %s305 = scalar_select %p304, %s303, 7
          %s306 = smul.addr %s305, 8
          %s307 = scalar_lea.vmem %s1, %s306
          %s308 = smul.u32 4, %s16
        $region52: #{tpu_custom_call.1} parent=43 // pred_fallthru
          _
      $region44: #{tpu_custom_call.1} parent=5 // pred_fallthru
        _
      %p309 = scmp.le.s32.totalorder 1, %s16
      %p310 = scmp.lt.s32.totalorder %s16, 3
      %p311 = pnand %p309, %p310
      %p312 = pneg %p311
      // Predicated region
      $region53: #{tpu_custom_call.1} parent=5 // pred_check
        _
      $region54: #{tpu_custom_call.1} parent=5 // pred_check_branch
        %314 = sbr.rel (%p311) target = $region56
      $region55: #{tpu_custom_call.1} parent=5 // pred_region
        %s315 = ssub.s32 %s16, 1
        // Predicated region
        $region57: #{tpu_custom_call.1} parent=55 // pred_check
          %p316 = pneg %p89
        $region58: #{tpu_custom_call.1} parent=55 // pred_check_branch
          %318 = sbr.rel (%p316) target = $region60
        $region59: #{tpu_custom_call.1} parent=55 // pred_region
          %319 = dma.done [#allocation3], 3072
        $region60: #{tpu_custom_call.1} parent=55 // pred_fallthru
          _
        %s320 = smul.u32 4, %s21
        %p321 = scmp.lt.s32.totalorder %s320, 7
        %s322 = scalar_select %p321, %s320, 7
        %s323 = smul.addr %s322, 4
        %s324 = scalar_lea.vmem %s0, %s323
        %p325 = pneg %p42
        %p326 = pneg %p39
        %s327 = smul.u32 4, %s21
        %p328 = scmp.lt.s32.totalorder %s327, 7
        %s329 = scalar_select %p328, %s327, 7
        %s330 = smul.addr %s329, 8
        %s331 = scalar_lea.vmem %s1, %s330
        %p332 = pneg %p68
        %p333 = pneg %p65
        %p334 = pneg %p89
        %p335 = pneg %p86
        %p336 = pneg %p110
        %p337 = pneg %p107
        %p338 = pneg %p131
        %p339 = pneg %p128
        %p340 = pneg %p152
        %p341 = pneg %p149
        %p342 = pneg %p173
        %p343 = pneg %p170
        %p344 = pneg %p194
        %p345 = pneg %p191
        %p346 = pneg %p215
        %p347 = pneg %p212
        %p348 = pneg %p241
        %p349 = pneg %p238
        %s350 = smul.u32 4, %s21
        %p351 = scmp.lt.s32.totalorder %s350, 7
        %s352 = scalar_select %p351, %s350, 7
        %s353 = smul.addr %s352, 8
        %s354 = scalar_lea.vmem %s9, %s353
        %s355 = smul.u32 4, %s21
        %p356 = scmp.lt.s32.totalorder %s355, 7
        %s357 = scalar_select %p356, %s355, 7
        %s358 = smul.addr %s357, 4
        %s359 = scalar_lea.vmem %s0, %s358
        %s360 = smul.u32 4, %s21
        %s361 = smul.u32 4, %s21
        %p362 = scmp.lt.s32.totalorder %s361, 7
        %s363 = scalar_select %p362, %s361, 7
        %s364 = smul.addr %s363, 8
        %s365 = scalar_lea.vmem %s1, %s364
        %s366 = smul.u32 4, %s21
        %s367 = smul.u32 4, %s21
        %p368 = scmp.lt.s32.totalorder %s367, 7
        %s369 = scalar_select %p368, %s367, 7
        %s370 = smul.addr %s369, 8
        %s371 = scalar_lea.vmem %s9, %s370
        %s372 = smul.u32 4, %s21
        %v374 = vld [vmem:[%s365] sm:$0xff]
        %v375 = vld [vmem:[%s365 + $0x8] sm:$0xff]
        %v376 = vld [vmem:[%s365 + $0x10] sm:$0xff]
        %v377 = vld [vmem:[%s365 + $0x18] sm:$0xff]
        %v378 = vlaneseq
        %v379 = vand.u32 %v378, 127
        %380 = vset.pattern.permute.xlu0 0
        %381 = vperm.xlu0 %380, %v374
        %v382 = vpop.permute.xlu0 %381
        %383 = vset.pattern.permute.xlu0 0
        %384 = vperm.xlu0 %383, %v375
        %v385 = vpop.permute.xlu0 %384
        %386 = vset.pattern.permute.xlu0 0
        %387 = vperm.xlu0 %386, %v376
        %v388 = vpop.permute.xlu0 %387
        %389 = vset.pattern.permute.xlu0 0
        %390 = vperm.xlu0 %389, %v377
        %v391 = vpop.permute.xlu0 %390
        %vm392 = vcmp.eq.s32.totalorder %v379, %v382
        %vm393 = vcmp.eq.s32.totalorder %v379, %v385
        %vm394 = vcmp.eq.s32.totalorder %v379, %v388
        %vm395 = vcmp.eq.s32.totalorder %v379, %v391
        %396 = vset.pattern.permute.xlu0 1
        %397 = vperm.xlu0 %396, %v374
        %v398 = vpop.permute.xlu0 %397
        %399 = vset.pattern.permute.xlu0 1
        %400 = vperm.xlu0 %399, %v375
        %v401 = vpop.permute.xlu0 %400
        %402 = vset.pattern.permute.xlu0 1
        %403 = vperm.xlu0 %402, %v376
        %v404 = vpop.permute.xlu0 %403
        %405 = vset.pattern.permute.xlu0 1
        %406 = vperm.xlu0 %405, %v377
        %v407 = vpop.permute.xlu0 %406
        %vm408 = vcmp.eq.s32.totalorder %v379, %v398
        %vm409 = vcmp.eq.s32.totalorder %v379, %v401
        %vm410 = vcmp.eq.s32.totalorder %v379, %v404
        %vm411 = vcmp.eq.s32.totalorder %v379, %v407
        %vm412 = vmor %vm392, %vm408
        %vm413 = vmor %vm393, %vm409
        %vm414 = vmor %vm394, %vm410
        %vm415 = vmor %vm395, %vm411
        %v416 = vsel %vm412, 1, 0
        %v417 = vsel %vm413, 1, 0
        %v418 = vsel %vm414, 1, 0
        %v419 = vsel %vm415, 1, 0
        %v420 = vcvt.s32.f32 %v416
        %v421 = vcvt.s32.f32 %v417
        %v422 = vcvt.s32.f32 %v418
        %v423 = vcvt.s32.f32 %v419
        %v424 = vpack.c.bf16 %v421, %v420
        %v425 = vpack.c.bf16 %v423, %v422
        %v426 = vld [vmem:[#allocation2] sm:$0xff]
        %v427 = vld [vmem:[#allocation2 + $0x8] sm:$0xf]
        %v428 = vld [vmem:[#allocation2 + $0xc] sm:$0xff]
        %v429 = vld [vmem:[#allocation2 + $0x14] sm:$0xf]
        %v430 = vld [vmem:[#allocation2 + $0x18] sm:$0xff]
        %v431 = vld [vmem:[#allocation2 + $0x20] sm:$0xf]
        %v432 = vld [vmem:[#allocation2 + $0x24] sm:$0xff]
        %v433 = vld [vmem:[#allocation2 + $0x2c] sm:$0xf]
        %v434 = vld [vmem:[#allocation2 + $0x30] sm:$0xff]
        %v435 = vld [vmem:[#allocation2 + $0x38] sm:$0xf]
        %v436 = vld [vmem:[#allocation2 + $0x3c] sm:$0xff]
        %v437 = vld [vmem:[#allocation2 + $0x44] sm:$0xf]
        %v438 = vld [vmem:[#allocation2 + $0x48] sm:$0xff]
        %v439 = vld [vmem:[#allocation2 + $0x50] sm:$0xf]
        %v440 = vld [vmem:[#allocation2 + $0x54] sm:$0xff]
        %v441 = vld [vmem:[#allocation2 + $0x5c] sm:$0xf]
        %v442 = vld [vmem:[#allocation2 + $0x60] sm:$0xff]
        %v443 = vld [vmem:[#allocation2 + $0x68] sm:$0xf]
        %v444 = vld [vmem:[#allocation2 + $0x6c] sm:$0xff]
        %v445 = vld [vmem:[#allocation2 + $0x74] sm:$0xf]
        %v446 = vld [vmem:[#allocation2 + $0x78] sm:$0xff]
        %v447 = vld [vmem:[#allocation2 + $0x80] sm:$0xf]
        %v448 = vld [vmem:[#allocation2 + $0x84] sm:$0xff]
        %v449 = vld [vmem:[#allocation2 + $0x8c] sm:$0xf]
        %v450 = vld [vmem:[#allocation2 + $0x90] sm:$0xff]
        %v451 = vld [vmem:[#allocation2 + $0x98] sm:$0xf]
        %v452 = vld [vmem:[#allocation2 + $0x9c] sm:$0xff]
        %v453 = vld [vmem:[#allocation2 + $0xa4] sm:$0xf]
        %v454 = vld [vmem:[#allocation2 + $0xa8] sm:$0xff]
        %v455 = vld [vmem:[#allocation2 + $0xb0] sm:$0xf]
        %v456 = vld [vmem:[#allocation2 + $0xb4] sm:$0xff]
        %v457 = vld [vmem:[#allocation2 + $0xbc] sm:$0xf]
        %v458 = vld [vmem:[%s3] sm:$0x7]
        %v460 = vlaneseq
        %v461 = vshrl.u32 %v460, 7
        %v462 = vsub.s32 0, %v461
        %v463 = vrot.slane %v458, %v462
        %v464 = vlaneseq
        %v465 = vshrl.u32 %v464, 7
        %v466 = vsub.s32 1, %v465
        %v467 = vrot.slane %v458, %v466
        %v468 = vlaneseq
        %v469 = vshrl.u32 %v468, 7
        %v470 = vsub.s32 2, %v469
        %v471 = vrot.slane %v458, %v470
        %v507 = vunpack.c.l.b16 %v426
        %v508 = vunpack.c.h.b16 %v426
        %v509 = vunpack.c.l.b16 %v427
        %v510 = vunpack.c.l.b16 %v428
        %v511 = vunpack.c.h.b16 %v428
        %v512 = vunpack.c.l.b16 %v429
        %v513 = vunpack.c.l.b16 %v430
        %v514 = vunpack.c.h.b16 %v430
        %v515 = vunpack.c.l.b16 %v431
        %v516 = vunpack.c.l.b16 %v432
        %v517 = vunpack.c.h.b16 %v432
        %v518 = vunpack.c.l.b16 %v433
        %v519 = vunpack.c.l.b16 %v434
        %v520 = vunpack.c.h.b16 %v434
        %v521 = vunpack.c.l.b16 %v435
        %v522 = vunpack.c.l.b16 %v436
        %v523 = vunpack.c.h.b16 %v436
        %v524 = vunpack.c.l.b16 %v437
        %v525 = vunpack.c.l.b16 %v438
        %v526 = vunpack.c.h.b16 %v438
        %v527 = vunpack.c.l.b16 %v439
        %v528 = vunpack.c.l.b16 %v440
        %v529 = vunpack.c.h.b16 %v440
        %v530 = vunpack.c.l.b16 %v441
        %v531 = vunpack.c.l.b16 %v442
        %v532 = vunpack.c.h.b16 %v442
        %v533 = vunpack.c.l.b16 %v443
        %v534 = vunpack.c.l.b16 %v444
        %v535 = vunpack.c.h.b16 %v444
        %v536 = vunpack.c.l.b16 %v445
        %v537 = vunpack.c.l.b16 %v446
        %v538 = vunpack.c.h.b16 %v446
        %v539 = vunpack.c.l.b16 %v447
        %v540 = vunpack.c.l.b16 %v448
        %v541 = vunpack.c.h.b16 %v448
        %v542 = vunpack.c.l.b16 %v449
        %v543 = vunpack.c.l.b16 %v450
        %v544 = vunpack.c.h.b16 %v450
        %v545 = vunpack.c.l.b16 %v451
        %v546 = vunpack.c.l.b16 %v452
        %v547 = vunpack.c.h.b16 %v452
        %v548 = vunpack.c.l.b16 %v453
        %v549 = vunpack.c.l.b16 %v454
        %v550 = vunpack.c.h.b16 %v454
        %v551 = vunpack.c.l.b16 %v455
        %v552 = vunpack.c.l.b16 %v456
        %v553 = vunpack.c.h.b16 %v456
        %v554 = vunpack.c.l.b16 %v457
        %v555 = vpack.c.b16 %v510, %v507
        %v556 = vpack.c.b16 %v511, %v508
        %v557 = vpack.c.b16 %v512, %v509
        %v558 = vpack.c.b16 %v516, %v513
        %v559 = vpack.c.b16 %v517, %v514
        %v560 = vpack.c.b16 %v518, %v515
        %v561 = vpack.c.b16 %v522, %v519
        %v562 = vpack.c.b16 %v523, %v520
        %v563 = vpack.c.b16 %v524, %v521
        %v564 = vpack.c.b16 %v528, %v525
        %v565 = vpack.c.b16 %v529, %v526
        %v566 = vpack.c.b16 %v530, %v527
        %v567 = vpack.c.b16 %v534, %v531
        %v568 = vpack.c.b16 %v535, %v532
        %v569 = vpack.c.b16 %v536, %v533
        %v570 = vpack.c.b16 %v540, %v537
        %v571 = vpack.c.b16 %v541, %v538
        %v572 = vpack.c.b16 %v542, %v539
        %v573 = vpack.c.b16 %v546, %v543
        %v574 = vpack.c.b16 %v547, %v544
        %v575 = vpack.c.b16 %v548, %v545
        %v576 = vpack.c.b16 %v552, %v549
        %v577 = vpack.c.b16 %v553, %v550
        %v578 = vpack.c.b16 %v554, %v551
        %603 = vmatprep.subr.bf16.mxu0 %v577
        %604 = vmatpush1.bf16.msra.mxu0 %v576
        %605 = vmatprep.subr.bf16.mxu0 %v574
        %606 = vmatpush1.bf16.msra.mxu0 %v573
        %607 = vmatprep.subr.bf16.mxu0 %v571
        %608 = vmatpush1.bf16.msra.mxu0 %v570
        %609 = vmatprep.subr.bf16.mxu0 %v568
        %610 = vmatpush1.bf16.msra.mxu0 %v567
        %611 = vmatprep.subr.bf16.mxu0 %v565
        %612 = vmatpush1.bf16.msra.mxu0 %v564
        %613 = vmatprep.subr.bf16.mxu0 %v562
        %614 = vmatpush1.bf16.msra.mxu0 %v561
        %615 = vmatprep.subr.bf16.mxu0 %v559
        %616 = vmatpush1.bf16.msra.mxu0 %v558
        %617 = vmatprep.subr.bf16.mxu0 %v556
        %618 = vmatpush1.bf16.msra.mxu0 %v555
        %619 = vmatprep.subr.bf16.mxu0 0
        %620 = vmatpush2.bf16.msra.mxu0 0
        %621 = vmatprep.subr.bf16.mxu0 0
        %622 = vmatpush2.bf16.msra.mxu0 0
        %623 = vmatprep.subr.bf16.mxu0 0
        %624 = vmatpush2.bf16.msra.mxu0 0
        %625 = vmatprep.subr.bf16.mxu0 0
        %626 = vmatpush2.bf16.msra.mxu0 0
        %627 = vmatprep.subr.bf16.mxu0 0
        %628 = vmatpush2.bf16.msra.mxu0 0
        %629 = vmatprep.subr.bf16.mxu0 0
        %630 = vmatpush2.bf16.msra.mxu0 0
        %631 = vmatprep.subr.bf16.mxu0 0
        %632 = vmatpush2.bf16.msra.mxu0 0
        %633 = vmatprep.subr.bf16.mxu0 0
        %634 = vmatpush2.bf16.msra.mxu0 0
        %635 = vmatprep.mubr.bf16.mxu0 0
        %636 = vmatmul.mubr.bf16.gmra.mxu0 %v424
        %v637 = vpop.f32.mrf.mxu0
        %v638 = vadd.f32 %v463, %v637
        %v639 = vpop.f32.mrf.mxu0
        %v640 = vadd.f32 %v467, %v639
        %v641 = vpop.f32.mrf.mxu0
        %v642 = vadd.f32 %v463, %v641
        %v643 = vpop.f32.mrf.mxu0
        %v644 = vadd.f32 %v467, %v643
        %645 = vmatprep.mubr.bf16.mxu0 0
        %646 = vmatmul.mubr.bf16.gmra.mxu0 %v425
        %v647 = vpop.f32.mrf.mxu0
        %v648 = vadd.f32 %v463, %v647
        %v649 = vpop.f32.mrf.mxu0
        %v650 = vadd.f32 %v467, %v649
        %v651 = vpop.f32.mrf.mxu0
        %v652 = vadd.f32 %v463, %v651
        %v653 = vpop.f32.mrf.mxu0
        %v654 = vadd.f32 %v467, %v653
        %655 = vdwg.mxu0
        %656 = vmatprep.subr.bf16.mxu0 0
        %657 = vmatpush1.bf16.msra.mxu0 %v578
        %658 = vmatprep.subr.bf16.mxu0 0
        %659 = vmatpush1.bf16.msra.mxu0 %v575
        %660 = vmatprep.subr.bf16.mxu0 0
        %661 = vmatpush1.bf16.msra.mxu0 %v572
        %662 = vmatprep.subr.bf16.mxu0 0
        %663 = vmatpush1.bf16.msra.mxu0 %v569
        %664 = vmatprep.subr.bf16.mxu0 0
        %665 = vmatpush1.bf16.msra.mxu0 %v566
        %666 = vmatprep.subr.bf16.mxu0 0
        %667 = vmatpush1.bf16.msra.mxu0 %v563
        %668 = vmatprep.subr.bf16.mxu0 0
        %669 = vmatpush1.bf16.msra.mxu0 %v560
        %670 = vmatprep.subr.bf16.mxu0 0
        %671 = vmatpush1.bf16.msra.mxu0 %v557
        %672 = vmatprep.subr.bf16.mxu0 0
        %673 = vmatpush2.bf16.msra.mxu0 0
        %674 = vmatprep.subr.bf16.mxu0 0
        %675 = vmatpush2.bf16.msra.mxu0 0
        %676 = vmatprep.subr.bf16.mxu0 0
        %677 = vmatpush2.bf16.msra.mxu0 0
        %678 = vmatprep.subr.bf16.mxu0 0
        %679 = vmatpush2.bf16.msra.mxu0 0
        %680 = vmatprep.subr.bf16.mxu0 0
        %681 = vmatpush2.bf16.msra.mxu0 0
        %682 = vmatprep.subr.bf16.mxu0 0
        %683 = vmatpush2.bf16.msra.mxu0 0
        %684 = vmatprep.subr.bf16.mxu0 0
        %685 = vmatpush2.bf16.msra.mxu0 0
        %686 = vmatprep.subr.bf16.mxu0 0
        %687 = vmatpush2.bf16.msra.mxu0 0
        %688 = vmatprep.mubr.bf16.mxu0 0
        %689 = vmatmul.mubr.bf16.gmra.mxu0 %v424
        %v690 = vpop.f32.mrf.mxu0
        %v691 = vadd.f32 %v471, %v690
        %v692 = vpop.f32.mrf.mxu0
        %v693 = vpop.f32.mrf.mxu0
        %v694 = vadd.f32 %v471, %v693
        %v695 = vpop.f32.mrf.mxu0
        %696 = vmatprep.mubr.bf16.mxu0 0
        %697 = vmatmul.mubr.bf16.gmra.mxu0 %v425
        %v698 = vpop.f32.mrf.mxu0
        %v699 = vadd.f32 %v471, %v698
        %v700 = vpop.f32.mrf.mxu0
        %v701 = vpop.f32.mrf.mxu0
        %v702 = vadd.f32 %v471, %v701
        %v703 = vpop.f32.mrf.mxu0
        %704 = vdwg.mxu0
        %v705 = vld [vmem:[%s359] sm:$0xf]
        %v706 = vld [vmem:[%s359 + $0x4] sm:$0xf]
        %v707 = vld [vmem:[%s359 + $0x8] sm:$0xf]
        %v708 = vld [vmem:[%s359 + $0xc] sm:$0xf]
        %v709 = vld [vmem:[%s4] sm:$0xf]
        %v710 = vld [vmem:[%s4 + $0x4] sm:$0xf]
        %v711 = vld [vmem:[%s4 + $0x8] sm:$0x3]
        %v716 = vunpack.c.l.b16 %v705
        %v717 = vunpack.c.l.b16 %v706
        %v718 = vunpack.c.l.b16 %v707
        %v719 = vunpack.c.l.b16 %v708
        %v720 = vpack.c.b16 %v717, %v716
        %v721 = vpack.c.b16 %v719, %v718
        %v725 = vunpack.c.l.b16 %v709
        %v726 = vunpack.c.l.b16 %v710
        %v727 = vunpack.c.l.b16 %v711
        %v728 = vpack.c.b16 %v726, %v725
        %v729 = vpack.c.b16 %v727, %v727
        %vm731 = vcmask 162816
        %v733 = vsel %vm731, %v720, 0
        %v736 = vsel %vm731, %v721, 0
        %vm738 = vcmask 1041408
        %v740 = vsel %vm738, %v729, 0
        %742 = vmatprep.subr.bf16.mxu0 0
        %743 = vmatpush1.bf16.msra.mxu0 0
        %744 = vmatprep.subr.bf16.mxu0 0
        %745 = vmatpush1.bf16.msra.mxu0 0
        %746 = vmatprep.subr.bf16.mxu0 0
        %747 = vmatpush1.bf16.msra.mxu0 0
        %748 = vmatprep.subr.bf16.mxu0 0
        %749 = vmatpush1.bf16.msra.mxu0 0
        %750 = vmatprep.subr.bf16.mxu0 0
        %751 = vmatpush1.bf16.msra.mxu0 0
        %752 = vmatprep.subr.bf16.mxu0 0
        %753 = vmatpush1.bf16.msra.mxu0 0
        %754 = vmatprep.subr.bf16.mxu0 0
        %755 = vmatpush1.bf16.msra.mxu0 %v740
        %756 = vmatprep.subr.bf16.mxu0 0
        %757 = vmatpush1.bf16.msra.mxu0 %v728
        %758 = vmatprep.subr.bf16.mxu0 0
        %759 = vmatpush2.bf16.msra.mxu0 0
        %760 = vmatprep.subr.bf16.mxu0 0
        %761 = vmatpush2.bf16.msra.mxu0 0
        %762 = vmatprep.subr.bf16.mxu0 0
        %763 = vmatpush2.bf16.msra.mxu0 0
        %764 = vmatprep.subr.bf16.mxu0 0
        %765 = vmatpush2.bf16.msra.mxu0 0
        %766 = vmatprep.subr.bf16.mxu0 0
        %767 = vmatpush2.bf16.msra.mxu0 0
        %768 = vmatprep.subr.bf16.mxu0 0
        %769 = vmatpush2.bf16.msra.mxu0 0
        %770 = vmatprep.subr.bf16.mxu0 0
        %771 = vmatpush2.bf16.msra.mxu0 0
        %772 = vmatprep.subr.bf16.mxu0 0
        %773 = vmatpush2.bf16.msra.mxu0 0
        %774 = vmatprep.mubr.bf16.mxu0 0
        %775 = vmatmul.mubr.bf16.gmra.mxu0 %v733
        %v776 = vpop.f32.mrf.mxu0
        %v777 = vadd.f32 %v638, %v776
        %v778 = vpop.f32.mrf.mxu0
        %v779 = vpop.f32.mrf.mxu0
        %v780 = vadd.f32 %v642, %v779
        %v781 = vpop.f32.mrf.mxu0
        %782 = vmatprep.mubr.bf16.mxu0 0
        %783 = vmatmul.mubr.bf16.gmra.mxu0 %v736
        %v784 = vpop.f32.mrf.mxu0
        %v785 = vadd.f32 %v648, %v784
        %v786 = vpop.f32.mrf.mxu0
        %v787 = vpop.f32.mrf.mxu0
        %v788 = vadd.f32 %v652, %v787
        %v789 = vpop.f32.mrf.mxu0
        %790 = vdwg.mxu0
        %v791 = vmax.f32 %v777, 0.0
        %v792 = vmax.f32 %v780, 0.0
        %v793 = vmax.f32 %v785, 0.0
        %v794 = vmax.f32 %v788, 0.0
        %v795 = vpack.c.bf16 %v792, %v791
        %v796 = vpack.c.bf16 %v794, %v793
        %v797 = vld [vmem:[%s5] sm:$0xf]
        %v798 = vld [vmem:[%s5 + $0x4] sm:$0xf]
        %v799 = vld [vmem:[%s5 + $0x8] sm:$0xf]
        %v800 = vld [vmem:[%s5 + $0xc] sm:$0xf]
        %v801 = vld [vmem:[%s5 + $0x10] sm:$0xf]
        %v802 = vld [vmem:[%s5 + $0x14] sm:$0xf]
        %v803 = vld [vmem:[%s5 + $0x18] sm:$0xf]
        %v804 = vld [vmem:[%s5 + $0x1c] sm:$0xf]
        %v805 = vld [vmem:[%s5 + $0x20] sm:$0xf]
        %v806 = vld [vmem:[%s5 + $0x24] sm:$0xf]
        %v807 = vld [vmem:[%s5 + $0x28] sm:$0xf]
        %v808 = vld [vmem:[%s5 + $0x2c] sm:$0xf]
        %v809 = vld [vmem:[%s5 + $0x30] sm:$0xf]
        %v810 = vld [vmem:[%s5 + $0x34] sm:$0xf]
        %v811 = vld [vmem:[%s5 + $0x38] sm:$0xf]
        %v812 = vld [vmem:[%s5 + $0x3c] sm:$0xf]
        %v829 = vunpack.c.l.b16 %v797
        %v830 = vunpack.c.l.b16 %v798
        %v831 = vunpack.c.l.b16 %v799
        %v832 = vunpack.c.l.b16 %v800
        %v833 = vunpack.c.l.b16 %v801
        %v834 = vunpack.c.l.b16 %v802
        %v835 = vunpack.c.l.b16 %v803
        %v836 = vunpack.c.l.b16 %v804
        %v837 = vunpack.c.l.b16 %v805
        %v838 = vunpack.c.l.b16 %v806
        %v839 = vunpack.c.l.b16 %v807
        %v840 = vunpack.c.l.b16 %v808
        %v841 = vunpack.c.l.b16 %v809
        %v842 = vunpack.c.l.b16 %v810
        %v843 = vunpack.c.l.b16 %v811
        %v844 = vunpack.c.l.b16 %v812
        %v845 = vpack.c.b16 %v830, %v829
        %v846 = vpack.c.b16 %v832, %v831
        %v847 = vpack.c.b16 %v834, %v833
        %v848 = vpack.c.b16 %v836, %v835
        %v849 = vpack.c.b16 %v838, %v837
        %v850 = vpack.c.b16 %v840, %v839
        %v851 = vpack.c.b16 %v842, %v841
        %v852 = vpack.c.b16 %v844, %v843
        %861 = vmatprep.subr.bf16.mxu0 0
        %862 = vmatpush1.bf16.msra.mxu0 %v852
        %863 = vmatprep.subr.bf16.mxu0 0
        %864 = vmatpush1.bf16.msra.mxu0 %v851
        %865 = vmatprep.subr.bf16.mxu0 0
        %866 = vmatpush1.bf16.msra.mxu0 %v850
        %867 = vmatprep.subr.bf16.mxu0 0
        %868 = vmatpush1.bf16.msra.mxu0 %v849
        %869 = vmatprep.subr.bf16.mxu0 0
        %870 = vmatpush1.bf16.msra.mxu0 %v848
        %871 = vmatprep.subr.bf16.mxu0 0
        %872 = vmatpush1.bf16.msra.mxu0 %v847
        %873 = vmatprep.subr.bf16.mxu0 0
        %874 = vmatpush1.bf16.msra.mxu0 %v846
        %875 = vmatprep.subr.bf16.mxu0 0
        %876 = vmatpush1.bf16.msra.mxu0 %v845
        %877 = vmatprep.subr.bf16.mxu0 0
        %878 = vmatpush2.bf16.msra.mxu0 0
        %879 = vmatprep.subr.bf16.mxu0 0
        %880 = vmatpush2.bf16.msra.mxu0 0
        %881 = vmatprep.subr.bf16.mxu0 0
        %882 = vmatpush2.bf16.msra.mxu0 0
        %883 = vmatprep.subr.bf16.mxu0 0
        %884 = vmatpush2.bf16.msra.mxu0 0
        %885 = vmatprep.subr.bf16.mxu0 0
        %886 = vmatpush2.bf16.msra.mxu0 0
        %887 = vmatprep.subr.bf16.mxu0 0
        %888 = vmatpush2.bf16.msra.mxu0 0
        %889 = vmatprep.subr.bf16.mxu0 0
        %890 = vmatpush2.bf16.msra.mxu0 0
        %891 = vmatprep.subr.bf16.mxu0 0
        %892 = vmatpush2.bf16.msra.mxu0 0
        %893 = vmatprep.mubr.bf16.mxu0 0
        %894 = vmatmul.mubr.bf16.gmra.mxu0 %v795
        %v895 = vpop.f32.mrf.mxu0
        %v896 = vadd.f32 %v640, %v895
        %v897 = vpop.f32.mrf.mxu0
        %v898 = vpop.f32.mrf.mxu0
        %v899 = vadd.f32 %v644, %v898
        %v900 = vpop.f32.mrf.mxu0
        %901 = vmatprep.mubr.bf16.mxu0 0
        %902 = vmatmul.mubr.bf16.gmra.mxu0 %v796
        %v903 = vpop.f32.mrf.mxu0
        %v904 = vadd.f32 %v650, %v903
        %v905 = vpop.f32.mrf.mxu0
        %v906 = vpop.f32.mrf.mxu0
        %v907 = vadd.f32 %v654, %v906
        %v908 = vpop.f32.mrf.mxu0
        %909 = vdwg.mxu0
        %v910 = vmax.f32 %v896, 0.0
        %v911 = vmax.f32 %v899, 0.0
        %v912 = vmax.f32 %v904, 0.0
        %v913 = vmax.f32 %v907, 0.0
        %v914 = vpack.c.bf16 %v911, %v910
        %v915 = vpack.c.bf16 %v913, %v912
        %v916 = vld [vmem:[%s6] sm:$0xf]
        %v917 = vld [vmem:[%s6 + $0x4] sm:$0xf]
        %v918 = vld [vmem:[%s6 + $0x8] sm:$0xf]
        %v919 = vld [vmem:[%s6 + $0xc] sm:$0xf]
        %v920 = vld [vmem:[%s6 + $0x10] sm:$0xf]
        %v921 = vld [vmem:[%s6 + $0x14] sm:$0xf]
        %v922 = vld [vmem:[%s6 + $0x18] sm:$0xf]
        %v923 = vld [vmem:[%s6 + $0x1c] sm:$0xf]
        %v924 = vld [vmem:[%s6 + $0x20] sm:$0xf]
        %v925 = vld [vmem:[%s6 + $0x24] sm:$0xf]
        %v926 = vld [vmem:[%s6 + $0x28] sm:$0xf]
        %v927 = vld [vmem:[%s6 + $0x2c] sm:$0xf]
        %v928 = vld [vmem:[%s6 + $0x30] sm:$0xf]
        %v929 = vld [vmem:[%s6 + $0x34] sm:$0xf]
        %v930 = vld [vmem:[%s6 + $0x38] sm:$0xf]
        %v931 = vld [vmem:[%s6 + $0x3c] sm:$0xf]
        %v948 = vunpack.c.l.b16 %v916
        %v949 = vunpack.c.l.b16 %v917
        %v950 = vunpack.c.l.b16 %v918
        %v951 = vunpack.c.l.b16 %v919
        %v952 = vunpack.c.l.b16 %v920
        %v953 = vunpack.c.l.b16 %v921
        %v954 = vunpack.c.l.b16 %v922
        %v955 = vunpack.c.l.b16 %v923
        %v956 = vunpack.c.l.b16 %v924
        %v957 = vunpack.c.l.b16 %v925
        %v958 = vunpack.c.l.b16 %v926
        %v959 = vunpack.c.l.b16 %v927
        %v960 = vunpack.c.l.b16 %v928
        %v961 = vunpack.c.l.b16 %v929
        %v962 = vunpack.c.l.b16 %v930
        %v963 = vunpack.c.l.b16 %v931
        %v964 = vpack.c.b16 %v949, %v948
        %v965 = vpack.c.b16 %v951, %v950
        %v966 = vpack.c.b16 %v953, %v952
        %v967 = vpack.c.b16 %v955, %v954
        %v968 = vpack.c.b16 %v957, %v956
        %v969 = vpack.c.b16 %v959, %v958
        %v970 = vpack.c.b16 %v961, %v960
        %v971 = vpack.c.b16 %v963, %v962
        %980 = vmatprep.subr.bf16.mxu0 0
        %981 = vmatpush1.bf16.msra.mxu0 %v971
        %982 = vmatprep.subr.bf16.mxu0 0
        %983 = vmatpush1.bf16.msra.mxu0 %v970
        %984 = vmatprep.subr.bf16.mxu0 0
        %985 = vmatpush1.bf16.msra.mxu0 %v969
        %986 = vmatprep.subr.bf16.mxu0 0
        %987 = vmatpush1.bf16.msra.mxu0 %v968
        %988 = vmatprep.subr.bf16.mxu0 0
        %989 = vmatpush1.bf16.msra.mxu0 %v967
        %990 = vmatprep.subr.bf16.mxu0 0
        %991 = vmatpush1.bf16.msra.mxu0 %v966
        %992 = vmatprep.subr.bf16.mxu0 0
        %993 = vmatpush1.bf16.msra.mxu0 %v965
        %994 = vmatprep.subr.bf16.mxu0 0
        %995 = vmatpush1.bf16.msra.mxu0 %v964
        %996 = vmatprep.subr.bf16.mxu0 0
        %997 = vmatpush2.bf16.msra.mxu0 0
        %998 = vmatprep.subr.bf16.mxu0 0
        %999 = vmatpush2.bf16.msra.mxu0 0
        %1000 = vmatprep.subr.bf16.mxu0 0
        %1001 = vmatpush2.bf16.msra.mxu0 0
        %1002 = vmatprep.subr.bf16.mxu0 0
        %1003 = vmatpush2.bf16.msra.mxu0 0
        %1004 = vmatprep.subr.bf16.mxu0 0
        %1005 = vmatpush2.bf16.msra.mxu0 0
        %1006 = vmatprep.subr.bf16.mxu0 0
        %1007 = vmatpush2.bf16.msra.mxu0 0
        %1008 = vmatprep.subr.bf16.mxu0 0
        %1009 = vmatpush2.bf16.msra.mxu0 0
        %1010 = vmatprep.subr.bf16.mxu0 0
        %1011 = vmatpush2.bf16.msra.mxu0 0
        %1012 = vmatprep.mubr.bf16.mxu0 0
        %1013 = vmatmul.mubr.bf16.gmra.mxu0 %v914
        %v1014 = vpop.f32.mrf.mxu0
        %v1015 = vadd.f32 %v691, %v1014
        %v1016 = vpop.f32.mrf.mxu0
        %v1017 = vpop.f32.mrf.mxu0
        %v1018 = vadd.f32 %v694, %v1017
        %v1019 = vpop.f32.mrf.mxu0
        %1020 = vmatprep.mubr.bf16.mxu0 0
        %1021 = vmatmul.mubr.bf16.gmra.mxu0 %v915
        %v1022 = vpop.f32.mrf.mxu0
        %v1023 = vadd.f32 %v699, %v1022
        %v1024 = vpop.f32.mrf.mxu0
        %v1025 = vpop.f32.mrf.mxu0
        %v1026 = vadd.f32 %v702, %v1025
        %v1027 = vpop.f32.mrf.mxu0
        %1028 = vdwg.mxu0
        %v1029 = vmax.f32 %v1015, 0.0
        %v1030 = vmax.f32 %v1018, 0.0
        %v1031 = vmax.f32 %v1023, 0.0
        %v1032 = vmax.f32 %v1026, 0.0
        %v1033 = vpack.c.bf16 %v1030, %v1029
        %v1034 = vpack.c.bf16 %v1032, %v1031
        %v1035 = vld [vmem:[%s7] sm:$0xf]
        %v1036 = vld [vmem:[%s7 + $0x4] sm:$0xf]
        %v1037 = vld [vmem:[%s7 + $0x8] sm:$0xf]
        %v1038 = vld [vmem:[%s7 + $0xc] sm:$0xf]
        %v1039 = vld [vmem:[%s7 + $0x10] sm:$0xf]
        %v1040 = vld [vmem:[%s7 + $0x14] sm:$0xf]
        %v1041 = vld [vmem:[%s7 + $0x18] sm:$0xf]
        %v1042 = vld [vmem:[%s7 + $0x1c] sm:$0xf]
        %v1043 = vld [vmem:[%s7 + $0x20] sm:$0xf]
        %v1044 = vld [vmem:[%s7 + $0x24] sm:$0xf]
        %v1045 = vld [vmem:[%s7 + $0x28] sm:$0xf]
        %v1046 = vld [vmem:[%s7 + $0x2c] sm:$0xf]
        %v1047 = vld [vmem:[%s7 + $0x30] sm:$0xf]
        %v1048 = vld [vmem:[%s7 + $0x34] sm:$0xf]
        %v1049 = vld [vmem:[%s7 + $0x38] sm:$0xf]
        %v1050 = vld [vmem:[%s7 + $0x3c] sm:$0xf]
        %v1051 = vld [vmem:[%s8] sm:$0x1]
        %v1053 = vlaneseq
        %v1054 = vshrl.u32 %v1053, 7
        %v1055 = vsub.s32 0, %v1054
        %v1056 = vrot.slane %v1051, %v1055
        %v1074 = vunpack.c.l.b16 %v1035
        %v1075 = vunpack.c.l.b16 %v1036
        %v1076 = vunpack.c.l.b16 %v1037
        %v1077 = vunpack.c.l.b16 %v1038
        %v1078 = vunpack.c.l.b16 %v1039
        %v1079 = vunpack.c.l.b16 %v1040
        %v1080 = vunpack.c.l.b16 %v1041
        %v1081 = vunpack.c.l.b16 %v1042
        %v1082 = vunpack.c.l.b16 %v1043
        %v1083 = vunpack.c.l.b16 %v1044
        %v1084 = vunpack.c.l.b16 %v1045
        %v1085 = vunpack.c.l.b16 %v1046
        %v1086 = vunpack.c.l.b16 %v1047
        %v1087 = vunpack.c.l.b16 %v1048
        %v1088 = vunpack.c.l.b16 %v1049
        %v1089 = vunpack.c.l.b16 %v1050
        %v1090 = vpack.c.b16 %v1075, %v1074
        %v1091 = vpack.c.b16 %v1077, %v1076
        %v1092 = vpack.c.b16 %v1079, %v1078
        %v1093 = vpack.c.b16 %v1081, %v1080
        %v1094 = vpack.c.b16 %v1083, %v1082
        %v1095 = vpack.c.b16 %v1085, %v1084
        %v1096 = vpack.c.b16 %v1087, %v1086
        %v1097 = vpack.c.b16 %v1089, %v1088
        %1106 = vmatprep.subr.bf16.mxu0 0
        %1107 = vmatpush1.bf16.msra.mxu0 %v1097
        %1108 = vmatprep.subr.bf16.mxu0 0
        %1109 = vmatpush1.bf16.msra.mxu0 %v1096
        %1110 = vmatprep.subr.bf16.mxu0 0
        %1111 = vmatpush1.bf16.msra.mxu0 %v1095
        %1112 = vmatprep.subr.bf16.mxu0 0
        %1113 = vmatpush1.bf16.msra.mxu0 %v1094
        %1114 = vmatprep.subr.bf16.mxu0 0
        %1115 = vmatpush1.bf16.msra.mxu0 %v1093
        %1116 = vmatprep.subr.bf16.mxu0 0
        %1117 = vmatpush1.bf16.msra.mxu0 %v1092
        %1118 = vmatprep.subr.bf16.mxu0 0
        %1119 = vmatpush1.bf16.msra.mxu0 %v1091
        %1120 = vmatprep.subr.bf16.mxu0 0
        %1121 = vmatpush1.bf16.msra.mxu0 %v1090
        %1122 = vmatprep.subr.bf16.mxu0 0
        %1123 = vmatpush2.bf16.msra.mxu0 0
        %1124 = vmatprep.subr.bf16.mxu0 0
        %1125 = vmatpush2.bf16.msra.mxu0 0
        %1126 = vmatprep.subr.bf16.mxu0 0
        %1127 = vmatpush2.bf16.msra.mxu0 0
        %1128 = vmatprep.subr.bf16.mxu0 0
        %1129 = vmatpush2.bf16.msra.mxu0 0
        %1130 = vmatprep.subr.bf16.mxu0 0
        %1131 = vmatpush2.bf16.msra.mxu0 0
        %1132 = vmatprep.subr.bf16.mxu0 0
        %1133 = vmatpush2.bf16.msra.mxu0 0
        %1134 = vmatprep.subr.bf16.mxu0 0
        %1135 = vmatpush2.bf16.msra.mxu0 0
        %1136 = vmatprep.subr.bf16.mxu0 0
        %1137 = vmatpush2.bf16.msra.mxu0 0
        %1138 = vmatprep.mubr.bf16.mxu0 0
        %1139 = vmatmul.mubr.bf16.gmra.mxu0 %v1033
        %v1140 = vpop.f32.mrf.mxu0
        %v1141 = vadd.f32 %v1056, %v1140
        %v1142 = vpop.f32.mrf.mxu0
        %v1143 = vpop.f32.mrf.mxu0
        %v1144 = vadd.f32 %v1056, %v1143
        %v1145 = vpop.f32.mrf.mxu0
        %1146 = vmatprep.mubr.bf16.mxu0 0
        %1147 = vmatmul.mubr.bf16.gmra.mxu0 %v1034
        %v1148 = vpop.f32.mrf.mxu0
        %v1149 = vadd.f32 %v1056, %v1148
        %v1150 = vpop.f32.mrf.mxu0
        %v1151 = vpop.f32.mrf.mxu0
        %v1152 = vadd.f32 %v1056, %v1151
        %v1153 = vpop.f32.mrf.mxu0
        %1154 = vdwg.mxu0
        %1155 = vst.msk [vmem:[%s371] sm:$0xff] %vm731, %v1141
        %1156 = vst.msk [vmem:[%s371 + $0x8] sm:$0xff] %vm731, %v1144
        %1157 = vst.msk [vmem:[%s371 + $0x10] sm:$0xff] %vm731, %v1149
        %1158 = vst.msk [vmem:[%s371 + $0x18] sm:$0xff] %vm731, %v1152
        %s1159 = smul.u32 4, %s21
        %p1160 = scmp.lt.s32.totalorder %s1159, 7
        %s1161 = scalar_select %p1160, %s1159, 7
        %s1162 = smul.addr %s1161, 8
        %s1163 = scalar_lea.vmem %s9, %s1162
        // Predicated region
        $region61: #{tpu_custom_call.1} parent=55 // pred_check
          %p1164 = pneg %p238
        $region62: #{tpu_custom_call.1} parent=55 // pred_check_branch
          %1166 = sbr.rel (%p1164) target = $region64
        $region63: #{tpu_custom_call.1} parent=55 // pred_region
          %s1167 = smul.u32 4, %s21
        $region64: #{tpu_custom_call.1} parent=55 // pred_fallthru
          _
      $region56: #{tpu_custom_call.1} parent=5 // pred_fallthru
        _
      %p1168 = scmp.le.s32.totalorder 2, %s16
      // Predicated region
      $region65: #{tpu_custom_call.1} parent=5 // pred_check
        %p1169 = pneg %p1168
      $region66: #{tpu_custom_call.1} parent=5 // pred_check_branch
        %1171 = sbr.rel (%p1169) target = $region68
      $region67: #{tpu_custom_call.1} parent=5 // pred_region
        %s1172 = ssub.s32 %s16, 2
        // Predicated region
        $region69: #{tpu_custom_call.1} parent=67 // pred_check
          %p1173 = pneg %p244
        $region70: #{tpu_custom_call.1} parent=67 // pred_check_branch
          %1175 = sbr.rel (%p1173) target = $region72
        $region71: #{tpu_custom_call.1} parent=67 // pred_region
          %s1176 = smul.u32 4, %s22
          %p1177 = scmp.lt.s32.totalorder %s1176, 7
          %s1178 = scalar_select %p1177, %s1176, 7
          %s1179 = smul.addr %s1178, 8
          %s1180 = scalar_lea.vmem %s9, %s1179
        $region72: #{tpu_custom_call.1} parent=67 // pred_fallthru
          _
      $region68: #{tpu_custom_call.1} parent=5 // pred_fallthru
        _
    $region6: #{tpu_custom_call.1} parent=1 // loop_footer
      %s20 = sadd.s32 1, %s16
    $region7: #{tpu_custom_call.1} parent=1 // loop_footer_branch
      %15 = sbr.rel target = $region3
    $region8: #{tpu_custom_call.1} parent=1 // loop_exit
      _
    %1181 = vsyncpa [#allocation3], 1
    %s1182 = scalar_lea.sflag [#allocation3], 1
    %1183 = vsyncpa %s1182, 1

</llo_original>
